<compile_context>
chip_gen: v7x
topology: tpu7x:2x2x1
jax: 0.10.0
libtpu: 0.0.40
codegen_flags: <defaults>
</compile_context>

<pallas_src>
from typing import NamedTuple

import jax
import jax.numpy as jnp
from jax.experimental import pallas as pl
from jax.experimental.pallas import tpu as pltpu

MIB = 1024 * 1024


def _round_up(x, m):
    return ((x + m - 1) // m) * m


def _vmem_capacity_bytes():
    """Physical per-core VMEM; conservative v7x default if the query fails."""
    try:
        info = pltpu.get_tpu_info()
        cap = getattr(info, "vmem_capacity_bytes", None)
        if cap:
            return int(cap)
    except Exception:
        pass
    return 64 * MIB


def _pick_divisor_tile(total, quantum, desired):
    """Largest multiple of `quantum` that divides `total` and is <= `desired`.

    `total` must be a positive multiple of `quantum`, `desired >= quantum`.
    """
    m = total // quantum
    best = 1
    d = 1
    while d * d <= m:
        if m % d == 0:
            for cand in (d, m // d):
                if cand * quantum <= desired:
                    best = max(best, cand)
        d += 1
    return best * quantum


class AutoRecParams(NamedTuple):
    """Pre-packed (padded, compute-dtype) AutoRec parameters (built once at init)."""
    w_enc: jax.Array   # (Kp, Hp)  compute dtype, zero padded
    b_enc: jax.Array   # (1,  Hp)  f32
    w_dec: jax.Array   # (Hp, Np)  compute dtype, zero padded
    b_dec: jax.Array   # (1,  Np)  f32
    num_inputs: int
    hidden: int


def autorec_prepack(w_enc, b_enc, w_dec, b_dec, *, compute_dtype=jnp.bfloat16):
    """Pad weights to lane-dense shapes and cast to the compute dtype ONCE (model init).

    Zero padding is exact: padded K columns of x meet zero encoder rows, and padded
    hidden columns (sigmoid(0) = 0.5) meet zero decoder rows, so results are unchanged.
    """
    num_inputs, hidden = w_enc.shape
    assert w_dec.shape == (hidden, num_inputs)
    Kp = _round_up(num_inputs, 128)
    Hp = _round_up(hidden, 128)
    Np = _round_up(num_inputs, 512)   # multiple of 512 -> good divisor choices for tile_n

    wep = jnp.zeros((Kp, Hp), compute_dtype).at[:num_inputs, :hidden].set(
        w_enc.astype(compute_dtype))
    bep = jnp.zeros((1, Hp), jnp.float32).at[0, :hidden].set(b_enc.astype(jnp.float32))
    wdp = jnp.zeros((Hp, Np), compute_dtype).at[:hidden, :num_inputs].set(
        w_dec.astype(compute_dtype))
    bdp = jnp.zeros((1, Np), jnp.float32).at[0, :num_inputs].set(b_dec.astype(jnp.float32))
    return AutoRecParams(wep, bep, wdp, bdp, int(num_inputs), int(hidden))


def _autorec_fused_kernel(x_ref, we_ref, be_ref, wd_ref, bd_ref, o_ref):
    """Encoder + sigmoid + decoder in one step.

    Used when the grid collapses along an axis: nj == 1 (small item catalogs), or
    ni == 1 where x / w_enc blocks are grid-invariant (no re-DMA) and the recomputed
    encoder hides under decoder-weight DMA; both axes may then be megacore-parallel.
    """
    h = jnp.dot(x_ref[...], we_ref[...], preferred_element_type=jnp.float32)
    h = jax.nn.sigmoid(h + be_ref[...]).astype(wd_ref.dtype)
    y = jnp.dot(h, wd_ref[...], preferred_element_type=jnp.float32)
    o_ref[...] = (y + bd_ref[...]).astype(o_ref.dtype)


def _autorec_cached_kernel(x_ref, we_ref, be_ref, wd_ref, bd_ref, o_ref, h_ref):
    """Flipped loop nest: grid = (j item-column tiles [outer, in order], i batch tiles).

    At j == 0 the encoder runs once per batch tile and the sigmoid hidden state is
    cached in VMEM (h_ref[i]); every j > 0 reuses it, so the decoder weight slab
    (indexed only by j) streams from HBM exactly once for the whole batch.
    """
    j = pl.program_id(0)
    i = pl.program_id(1)

    @pl.when(j == 0)
    def _():
        h = jnp.dot(x_ref[...], we_ref[...], preferred_element_type=jnp.float32)
        h = jax.nn.sigmoid(h + be_ref[...])
        h_ref[i] = h.astype(h_ref.dtype)

    y = jnp.dot(h_ref[i], wd_ref[...], preferred_element_type=jnp.float32)
    o_ref[...] = (y + bd_ref[...]).astype(o_ref.dtype)


def _autorec_call(xp, params, tile_b, tile_n, out_dtype, vmem_limit_bytes,
                  decoder_weight_buffers):
    Bp, Kp = xp.shape
    Hp = params.w_enc.shape[1]
    Np = params.w_dec.shape[1]
    cdt = params.w_enc.dtype
    ni = Bp // tile_b
    nj = Np // tile_n
    use_cache = ni > 1 and nj > 1

    if use_cache:
        kernel = _autorec_cached_kernel
        # x is only consumed at j == 0; freeze its block index afterwards so the row
        # tiles are not re-fetched from HBM for every j (the body never reads them).
        x_index = lambda j, i: (jnp.where(j == 0, i, 0), 0)
        scratch = [pltpu.VMEM((ni, tile_b, Hp), cdt)]
        # j must run in order per core (the hidden-state cache is filled at j == 0);
        # i could be megacore-parallel but is kept "arbitrary" for portability.
        semantics = ("arbitrary", "arbitrary")
    else:
        kernel = _autorec_fused_kernel
        x_index = lambda j, i: (i, 0)
        scratch = []
        semantics = ("parallel", "parallel")

    wd_kwargs = {}
    if decoder_weight_buffers != 2:
        # e.g. 3 on v5e, where ~0.8 TB/s HBM exposes more DMA latency on the slab.
        wd_kwargs = dict(pipeline_mode=pl.Buffered(decoder_weight_buffers))

    return pl.pallas_call(
        kernel,
        out_shape=jax.ShapeDtypeStruct((Bp, Np), out_dtype),
        grid_spec=pltpu.PrefetchScalarGridSpec(
            num_scalar_prefetch=0,
            grid=(nj, ni),
            in_specs=[
                pl.BlockSpec((tile_b, Kp), x_index),                    # x row tile
                # Grid-invariant encoder weight/bias: single-buffered (constant index
                # map; double buffering would only double their VMEM footprint).
                pl.BlockSpec((Kp, Hp), lambda j, i: (0, 0),
                             pipeline_mode=pl.Buffered(1)),             # encoder W
                pl.BlockSpec((1, Hp), lambda j, i: (0, 0),
                             pipeline_mode=pl.Buffered(1)),             # encoder b
                pl.BlockSpec((Hp, tile_n), lambda j, i: (0, j),
                             **wd_kwargs),                              # decoder W slab
                pl.BlockSpec((1, tile_n), lambda j, i: (0, j)),         # decoder b slab
            ],
            out_specs=pl.BlockSpec((tile_b, tile_n), lambda j, i: (i, j)),
            scratch_shapes=scratch,
        ),
        compiler_params=pltpu.CompilerParams(
            dimension_semantics=semantics,
            vmem_limit_bytes=vmem_limit_bytes,
        ),
    )(xp, params.w_enc, params.b_enc, params.w_dec, params.b_dec)


def autorec_forward(x, params, *, tile_b=None, tile_n=None, out_dtype=None,
                    decoder_weight_buffers=2, max_cache_rows=4096):
    """AutoRec forward: sigmoid(x @ W_e + b_e) @ W_d + b_d, using pre-packed params."""
    B, K = x.shape
    if K != params.num_inputs:
        raise ValueError(f"x has {K} columns, model expects {params.num_inputs}")
    Kp, Hp = params.w_enc.shape
    Np = params.w_dec.shape[1]
    cdt = params.w_enc.dtype
    out_dtype = x.dtype if out_dtype is None else out_dtype
    cb = jnp.dtype(cdt).itemsize
    ob = jnp.dtype(out_dtype).itemsize

    # Per-generation sizing: v5e/v6e expose 128 MiB of VMEM, v7x 64 MiB per core.
    capacity = _vmem_capacity_bytes()
    big_vmem = capacity >= 96 * MIB
    vmem_limit = (100 if big_vmem else 48) * MIB

    # MXU-shaped defaults; bigger tiles on 128-MiB parts to amortize the ~0.35 us/step
    # pipeline overhead.  tile_b: multiple of 16 (bf16 sublane packing); tile_n: a
    # multiple of 128 that divides the padded item count.
    if tile_b is None:
        tile_b = 512 if big_vmem else 256
    if tile_n is None:
        tile_n = 2048 if big_vmem else 512
    tile_b = max(16, min(_round_up(tile_b, 16), _round_up(B, 16)))
    tile_n = _pick_divisor_tile(Np, 128, max(128, tile_n))

    # Shrink tiles until the resident-VMEM estimate fits the budget.
    # TODO(synk): add encoder K-tiling (reduction grid axis + f32 accumulator) so very
    # large item catalogs (x tile + w_enc > ~40 MiB) still compile on v7x's 64 MiB VMEM.
    def fits(tb, tn):
        rows = min(_round_up(B, tb), max(tb, (max_cache_rows // tb) * tb))
        ni, nj = rows // tb, Np // tn
        cache = rows * Hp * cb if (ni > 1 and nj > 1) else 0
        usage = (2 * tb * Kp * cb                 # x row tile (double buffered)
                 + Kp * Hp * cb + Hp * 4          # encoder weight + bias (single buffered)
                 + 2 * (Hp * tn * cb + tn * 4)    # decoder weight + bias slabs
                 + 2 * tb * tn * ob               # output tile
                 + cache)                         # hidden-state cache
        return usage <= int(0.8 * vmem_limit)

    while not fits(tile_b, tile_n):
        if tile_n > 128:
            tile_n = _pick_divisor_tile(Np, 128, tile_n // 2)
        elif tile_b > 64:
            tile_b = max(64, _round_up(tile_b // 2, 16))
        else:
            break   # smallest supported tiles; let the compiler have the final say

    Bp = _round_up(B, tile_b)
    rows_per_call = min(Bp, max(tile_b, (max_cache_rows // tile_b) * tile_b))

    # Only x is touched per call: cast to the compute dtype, pad only when needed.
    xp = x.astype(cdt)
    if Bp != B or Kp != K:
        xp = jnp.zeros((Bp, Kp), cdt).at[:B, :K].set(xp)

    if rows_per_call >= Bp:
        out = _autorec_call(xp, params, tile_b, tile_n, out_dtype, vmem_limit,
                            decoder_weight_buffers)
    else:
        parts = [
            _autorec_call(xp[r:r + rows_per_call], params, tile_b, tile_n, out_dtype,
                          vmem_limit, decoder_weight_buffers)
            for r in range(0, Bp, rows_per_call)
        ]
        out = jnp.concatenate(parts, axis=0)

    if Bp != B or Np != params.num_inputs:
        out = out[:B, :params.num_inputs]
    return out


def autorec_reference(x, w_enc, b_enc, w_dec, b_dec):
    h = jax.nn.sigmoid(x @ w_enc + b_enc)
    return h @ w_dec + b_dec


if __name__ == "__main__":
    def make_problem(key, batch, num_inputs, hidden_units):
        kx, k1, k2, k3, k4 = jax.random.split(key, 5)
        x = jax.random.normal(kx, (batch, num_inputs), dtype=jnp.float32)
        # PyTorch-style uniform(-1/sqrt(fan_in), 1/sqrt(fan_in)) init, stored
        # pre-transposed: w_enc (num_inputs, hidden), w_dec (hidden, num_inputs).
        eb = 1.0 / float(num_inputs) ** 0.5
        db = 1.0 / float(hidden_units) ** 0.5
        w_enc = jax.random.uniform(k1, (num_inputs, hidden_units), jnp.float32,
                                   minval=-eb, maxval=eb)
        b_enc = jax.random.uniform(k2, (hidden_units,), jnp.float32,
                                   minval=-eb, maxval=eb)
        w_dec = jax.random.uniform(k3, (hidden_units, num_inputs), jnp.float32,
                                   minval=-db, maxval=db)
        b_dec = jax.random.uniform(k4, (num_inputs,), jnp.float32,
                                   minval=-db, maxval=db)
        return x, w_enc, b_enc, w_dec, b_dec

    def run_and_check(key, batch, num_inputs, hidden_units, **fwd_kwargs):
        x, w_enc, b_enc, w_dec, b_dec = make_problem(key, batch, num_inputs, hidden_units)
        params = autorec_prepack(w_enc, b_enc, w_dec, b_dec)     # once, at "model init"
        out = jax.block_until_ready(autorec_forward(x, params, **fwd_kwargs))
        ref = autorec_reference(x, w_enc, b_enc, w_dec, b_dec)
        assert out.shape == ref.shape and out.dtype == x.dtype
        # bf16 matmul inputs (f32 accumulation) vs. f32 reference -> widened tolerance.
        assert jnp.allclose(out, ref, atol=3e-2, rtol=3e-2), \
            float(jnp.max(jnp.abs(out - ref)))

    k1, k2 = jax.random.split(jax.random.PRNGKey(0))
    # 1) Small problem (stand-in for the user-item matrix width / hidden_units=500):
    #    the grid collapses and the fused single-pass kernel runs.
    run_and_check(k1, batch=16, num_inputs=300, hidden_units=200)
    # 2) Forced small tiles so both grid axes are > 1: exercises the flipped-loop-nest
    #    kernel with the VMEM hidden-state cache (decoder weights stream from HBM once).
    run_and_check(k2, batch=160, num_inputs=300, hidden_units=200, tile_b=64, tile_n=128)

    print("KERNEL_OK")
</pallas_src>

<mosaic_0001>
module attributes {stable_mosaic.version = 11 : i64} {
  func.func @_autorec_fused_kernel(%arg0: i32, %arg1: i32, %arg2: memref<16x384xbf16, #tpu.memory_space<vmem>>, %arg3: memref<384x256xbf16, #tpu.memory_space<vmem>>, %arg4: memref<1x256xf32, #tpu.memory_space<vmem>>, %arg5: memref<256x512xbf16, #tpu.memory_space<vmem>>, %arg6: memref<1x512xf32, #tpu.memory_space<vmem>>, %arg7: memref<16x512xf32, #tpu.memory_space<vmem>>) attributes {dimension_semantics = [#tpu.dimension_semantics<parallel>, #tpu.dimension_semantics<parallel>], iteration_bounds = array<i64: 1, 1>, scalar_prefetch = 0 : i64, scratch_operands = 0 : i64, tpu.core_type = #tpu.core_type<tc>, window_params = [{transform_indices = @transform_0, window_bounds = array<i64: 16, 384>}, {pipeline_mode = #tpu.pipeline_mode<synchronous>, transform_indices = @transform_1, window_bounds = array<i64: 384, 256>}, {pipeline_mode = #tpu.pipeline_mode<synchronous>, transform_indices = @transform_2, window_bounds = array<i64: 1, 256>}, {transform_indices = @transform_3, window_bounds = array<i64: 256, 512>}, {transform_indices = @transform_4, window_bounds = array<i64: 1, 512>}, {transform_indices = @transform_5, window_bounds = array<i64: 16, 512>}]} {
    %c0 = arith.constant 0 : index
    %c0_0 = arith.constant 0 : index
    %0 = vector.load %arg2[%c0, %c0_0] : memref<16x384xbf16, #tpu.memory_space<vmem>>, vector<16x384xbf16>
    %c0_1 = arith.constant 0 : index
    %c0_2 = arith.constant 0 : index
    %1 = vector.load %arg3[%c0_1, %c0_2] : memref<384x256xbf16, #tpu.memory_space<vmem>>, vector<384x256xbf16>
    %cst = arith.constant dense<0.000000e+00> : vector<16x256xf32>
    %2 = tpu.matmul %0, %1, %cst {dimension_numbers = #tpu.dot_dimension_numbers<[1], [0], [0], [1], [0, 0, 1, 1], [], []>} : vector<16x384xbf16>, vector<384x256xbf16>, vector<16x256xf32> -> vector<16x256xf32>
    %c0_3 = arith.constant 0 : index
    %c0_4 = arith.constant 0 : index
    %3 = vector.load %arg4[%c0_3, %c0_4] : memref<1x256xf32, #tpu.memory_space<vmem>>, vector<1x256xf32>
    %4 = vector.broadcast %3 : vector<1x256xf32> to vector<16x256xf32>
    %5 = arith.addf %2, %4 : vector<16x256xf32>
    %6 = arith.negf %5 : vector<16x256xf32>
    %7 = math.exp %6 : vector<16x256xf32>
    %cst_5 = arith.constant 1.000000e+00 : f32
    %8 = vector.broadcast %cst_5 : f32 to vector<16x256xf32>
    %9 = arith.addf %8, %7 : vector<16x256xf32>
    %10 = arith.divf %8, %9 : vector<16x256xf32>
    %11 = arith.truncf %10 : vector<16x256xf32> to vector<16x256xbf16>
    %c0_6 = arith.constant 0 : index
    %c0_7 = arith.constant 0 : index
    %12 = vector.load %arg5[%c0_6, %c0_7] : memref<256x512xbf16, #tpu.memory_space<vmem>>, vector<256x512xbf16>
    %cst_8 = arith.constant dense<0.000000e+00> : vector<16x512xf32>
    %13 = tpu.matmul %11, %12, %cst_8 {dimension_numbers = #tpu.dot_dimension_numbers<[1], [0], [0], [1], [0, 0, 1, 1], [], []>} : vector<16x256xbf16>, vector<256x512xbf16>, vector<16x512xf32> -> vector<16x512xf32>
    %c0_9 = arith.constant 0 : index
    %c0_10 = arith.constant 0 : index
    %14 = vector.load %arg6[%c0_9, %c0_10] : memref<1x512xf32, #tpu.memory_space<vmem>>, vector<1x512xf32>
    %15 = vector.broadcast %14 : vector<1x512xf32> to vector<16x512xf32>
    %16 = arith.addf %13, %15 : vector<16x512xf32>
    %c0_11 = arith.constant 0 : index
    %c0_12 = arith.constant 0 : index
    %17 = vector.load %arg7[%c0_11, %c0_12] : memref<16x512xf32, #tpu.memory_space<vmem>>, vector<16x512xf32>
    tpu.vector_store %arg7[%c0_11, %c0_12], %16 {strides = array<i32>} : memref<16x512xf32, #tpu.memory_space<vmem>>, vector<16x512xf32>,
    return
  }
  func.func @transform_0(%arg0: i32, %arg1: i32) -> (i32, i32) {
    %c0_i32 = arith.constant 0 : i32
    %c0_i32_0 = arith.constant 0 : i32
    return %arg1, %c0_i32 : i32, i32
  }
  func.func @transform_1(%arg0: i32, %arg1: i32) -> (i32, i32) {
    %c0_i32 = arith.constant 0 : i32
    %c0_i32_0 = arith.constant 0 : i32
    %c0_i32_1 = arith.constant 0 : i32
    return %c0_i32, %c0_i32_0 : i32, i32
  }
  func.func @transform_2(%arg0: i32, %arg1: i32) -> (i32, i32) {
    %c0_i32 = arith.constant 0 : i32
    %c0_i32_0 = arith.constant 0 : i32
    %c0_i32_1 = arith.constant 0 : i32
    return %c0_i32, %c0_i32_0 : i32, i32
  }
  func.func @transform_3(%arg0: i32, %arg1: i32) -> (i32, i32) {
    %c0_i32 = arith.constant 0 : i32
    %c0_i32_0 = arith.constant 0 : i32
    return %c0_i32, %arg0 : i32, i32
  }
  func.func @transform_4(%arg0: i32, %arg1: i32) -> (i32, i32) {
    %c0_i32 = arith.constant 0 : i32
    %c0_i32_0 = arith.constant 0 : i32
    return %c0_i32, %arg0 : i32, i32
  }
  func.func @transform_5(%arg0: i32, %arg1: i32) -> (i32, i32) {
    %c0_i32 = arith.constant 0 : i32
    return %arg1, %arg0 : i32, i32
  }
}

</mosaic_0001>

<llo_original>
// kernel: tpu_custom_call.1
$region0: #{tpu_custom_call.1}
  #allocation0 [shape = 'u32[]', space=smem, size = 0x4, offset = 0x4, fixed_abs, tag = 'smem constant byte address 0x4 - core index']
  #allocation1 [shape = 'u32[144,128]{1,0:T(1,128)}', space=vmem, size = 0x12000, scoped, tag = 'internal scratch']
  %s0 = inlined_call_operand.hbm [shape: bf16[16,384], index: 0, kind: input, shape index: {}]
  %s1 = inlined_call_operand.hbm [shape: bf16[384,256], index: 1, kind: input, shape index: {}]
  %s2 = inlined_call_operand.vmem [shape: f32[1,256], index: 2, kind: input, shape index: {}]
  %s3 = inlined_call_operand.hbm [shape: bf16[256,512], index: 3, kind: input, shape index: {}]
  %s4 = inlined_call_operand.vmem [shape: f32[1,512], index: 4, kind: input, shape index: {}]
  %s5 = inlined_call_operand.hbm [shape: f32[16,512], index: 5, kind: output, shape index: {}]
  %s6 = sld [smem:[#allocation0]]
  $region42: #{tpu_custom_call.1} parent=0
    _
  %s8 = ssub.s32 1, %s6
  %s9 = scalar_select 0, %s8, %s6
  $region1: #{tpu_custom_call.1} parent=0
    #allocation2 [shape = 'u8[12288]{0}', space=vmem, size = 0x3000, scoped, tag = 'input window, operand 0, single buffered']
    #allocation3 [shape = 's32[1]{0}', space=sflag, size = 0x4, scoped, tag = 'scoped memory for tpu_custom_call.1']
    #allocation4 [shape = 's32[1]{0}', space=sflag, size = 0x4, scoped, tag = 'scoped memory for tpu_custom_call.1']
    #allocation5 [shape = 'u8[196608]{0}', space=vmem, size = 0x30000, scoped, tag = 'input window, operand 1, single buffered']
    #allocation6 [shape = 's32[1]{0}', space=sflag, size = 0x4, scoped, tag = 'scoped memory for tpu_custom_call.1']
    #allocation7 [shape = 'u8[262144]{0}', space=vmem, size = 0x40000, scoped, tag = 'input window, operand 3, single buffered']
    #allocation8 [shape = 'u8[32768]{0}', space=vmem, size = 0x8000, scoped, tag = 'output window, operand 0, single buffered']
    %10 = vsyncpa [#allocation3], 0
    %11 = vsyncpa [#allocation6], 0
    %12 = vsyncpa [#allocation4], 0
    // Predicated region
    $region2: #{tpu_custom_call.1} parent=1 // pred_check
      _
    $region3: #{tpu_custom_call.1} parent=1 // pred_check_branch
      %14 = sbr.rel (0) target = $region5
    $region4: #{tpu_custom_call.1} parent=1 // pred_region
      %s16 = ssub.s32 384, 384
      %17 = vsyncadd [#allocation3], %s16
      %s18 = sshll.u32 [#allocation2], 4
      %s19 = int_to_ptr.vmem [resolvable:$true] %s18
      %24 = dma.hbm_to_vmem [thread:$0]  %s0, 384, %s19, [#allocation3], 192, 192, 12
    $region5: #{tpu_custom_call.1} parent=1 // pred_fallthru
      _
    // Predicated region
    $region6: #{tpu_custom_call.1} parent=1 // pred_check
      _
    $region7: #{tpu_custom_call.1} parent=1 // pred_check_branch
      %26 = sbr.rel (0) target = $region9
    $region8: #{tpu_custom_call.1} parent=1 // pred_region
      %s28 = ssub.s32 6144, 6144
      %29 = vsyncadd [#allocation6], %s28
      %s30 = sshll.u32 [#allocation5], 4
      %s31 = int_to_ptr.vmem [resolvable:$true] %s30
      %36 = dma.hbm_to_vmem [thread:$0]  %s1, 6144, %s31, [#allocation6], 128, 128, 8
    $region9: #{tpu_custom_call.1} parent=1 // pred_fallthru
      _
    // Predicated region
    $region10: #{tpu_custom_call.1} parent=1 // pred_check
      _
    $region11: #{tpu_custom_call.1} parent=1 // pred_check_branch
      %38 = sbr.rel (0) target = $region13
    $region12: #{tpu_custom_call.1} parent=1 // pred_region
      _
    $region13: #{tpu_custom_call.1} parent=1 // pred_fallthru
      _
    // Predicated region
    $region14: #{tpu_custom_call.1} parent=1 // pred_check
      _
    $region15: #{tpu_custom_call.1} parent=1 // pred_check_branch
      %40 = sbr.rel (0) target = $region17
    $region16: #{tpu_custom_call.1} parent=1 // pred_region
      %s42 = ssub.s32 8192, 8192
      %43 = vsyncadd [#allocation6], %s42
      %s44 = sshll.u32 [#allocation7], 4
      %s45 = int_to_ptr.vmem [resolvable:$true] %s44
      %50 = dma.hbm_to_vmem [thread:$0]  %s3, 8192, %s45, [#allocation6], 256, 256, 16
    $region17: #{tpu_custom_call.1} parent=1 // pred_fallthru
      _
    // Predicated region
    $region18: #{tpu_custom_call.1} parent=1 // pred_check
      _
    $region19: #{tpu_custom_call.1} parent=1 // pred_check_branch
      %52 = sbr.rel (0) target = $region21
    $region20: #{tpu_custom_call.1} parent=1 // pred_region
      _
    $region21: #{tpu_custom_call.1} parent=1 // pred_fallthru
      _
    // Predicated region
    $region22: #{tpu_custom_call.1} parent=1 // pred_check
      _
    $region23: #{tpu_custom_call.1} parent=1 // pred_check_branch
      %54 = sbr.rel (0) target = $region25
    $region24: #{tpu_custom_call.1} parent=1 // pred_region
      %55 = dma.done [#allocation3], 384
    $region25: #{tpu_custom_call.1} parent=1 // pred_fallthru
      _
    // Predicated region
    $region26: #{tpu_custom_call.1} parent=1 // pred_check
      _
    $region27: #{tpu_custom_call.1} parent=1 // pred_check_branch
      %57 = sbr.rel (0) target = $region29
    $region28: #{tpu_custom_call.1} parent=1 // pred_region
      %58 = dma.done [#allocation6], 6144
    $region29: #{tpu_custom_call.1} parent=1 // pred_fallthru
      _
    // Predicated region
    $region30: #{tpu_custom_call.1} parent=1 // pred_check
      _
    $region31: #{tpu_custom_call.1} parent=1 // pred_check_branch
      %60 = sbr.rel (0) target = $region33
    $region32: #{tpu_custom_call.1} parent=1 // pred_region
      %61 = dma.done [#allocation6], 8192
    $region33: #{tpu_custom_call.1} parent=1 // pred_fallthru
      _
    %v63 = vld [vmem:[#allocation2] sm:$0xff]
    %v64 = vld [vmem:[#allocation2 + $0x8] sm:$0xf]
    %v65 = vld [vmem:[#allocation2 + $0xc] sm:$0xff]
    %v66 = vld [vmem:[#allocation2 + $0x14] sm:$0xf]
    %v67 = vld [vmem:[#allocation5] sm:$0xff]
    %v68 = vld [vmem:[#allocation5 + $0x8] sm:$0xff]
    %v69 = vld [vmem:[#allocation5 + $0x10] sm:$0xff]
    %v70 = vld [vmem:[#allocation5 + $0x18] sm:$0xff]
    %v71 = vld [vmem:[#allocation5 + $0x20] sm:$0xff]
    %v72 = vld [vmem:[#allocation5 + $0x28] sm:$0xff]
    %v73 = vld [vmem:[#allocation5 + $0x30] sm:$0xff]
    %v74 = vld [vmem:[#allocation5 + $0x38] sm:$0xff]
    %v75 = vld [vmem:[#allocation5 + $0x40] sm:$0xff]
    %v76 = vld [vmem:[#allocation5 + $0x48] sm:$0xff]
    %v77 = vld [vmem:[#allocation5 + $0x50] sm:$0xff]
    %v78 = vld [vmem:[#allocation5 + $0x58] sm:$0xff]
    %v79 = vld [vmem:[#allocation5 + $0x60] sm:$0xff]
    %v80 = vld [vmem:[#allocation5 + $0x68] sm:$0xff]
    %v81 = vld [vmem:[#allocation5 + $0x70] sm:$0xff]
    %v82 = vld [vmem:[#allocation5 + $0x78] sm:$0xff]
    %v83 = vld [vmem:[#allocation5 + $0x80] sm:$0xff]
    %v84 = vld [vmem:[#allocation5 + $0x88] sm:$0xff]
    %v85 = vld [vmem:[#allocation5 + $0x90] sm:$0xff]
    %v86 = vld [vmem:[#allocation5 + $0x98] sm:$0xff]
    %v87 = vld [vmem:[#allocation5 + $0xa0] sm:$0xff]
    %v88 = vld [vmem:[#allocation5 + $0xa8] sm:$0xff]
    %v89 = vld [vmem:[#allocation5 + $0xb0] sm:$0xff]
    %v90 = vld [vmem:[#allocation5 + $0xb8] sm:$0xff]
    %v91 = vld [vmem:[#allocation5 + $0xc0] sm:$0xff]
    %v92 = vld [vmem:[#allocation5 + $0xc8] sm:$0xff]
    %v93 = vld [vmem:[#allocation5 + $0xd0] sm:$0xff]
    %v94 = vld [vmem:[#allocation5 + $0xd8] sm:$0xff]
    %v95 = vld [vmem:[#allocation5 + $0xe0] sm:$0xff]
    %v96 = vld [vmem:[#allocation5 + $0xe8] sm:$0xff]
    %v97 = vld [vmem:[#allocation5 + $0xf0] sm:$0xff]
    %v98 = vld [vmem:[#allocation5 + $0xf8] sm:$0xff]
    %v99 = vld [vmem:[#allocation5 + $0x100] sm:$0xff]
    %v100 = vld [vmem:[#allocation5 + $0x108] sm:$0xff]
    %v101 = vld [vmem:[#allocation5 + $0x110] sm:$0xff]
    %v102 = vld [vmem:[#allocation5 + $0x118] sm:$0xff]
    %v103 = vld [vmem:[#allocation5 + $0x120] sm:$0xff]
    %v104 = vld [vmem:[#allocation5 + $0x128] sm:$0xff]
    %v105 = vld [vmem:[#allocation5 + $0x130] sm:$0xff]
    %v106 = vld [vmem:[#allocation5 + $0x138] sm:$0xff]
    %v107 = vld [vmem:[#allocation5 + $0x140] sm:$0xff]
    %v108 = vld [vmem:[#allocation5 + $0x148] sm:$0xff]
    %v109 = vld [vmem:[#allocation5 + $0x150] sm:$0xff]
    %v110 = vld [vmem:[#allocation5 + $0x158] sm:$0xff]
    %v111 = vld [vmem:[#allocation5 + $0x160] sm:$0xff]
    %v112 = vld [vmem:[#allocation5 + $0x168] sm:$0xff]
    %v113 = vld [vmem:[#allocation5 + $0x170] sm:$0xff]
    %v114 = vld [vmem:[#allocation5 + $0x178] sm:$0xff]
    %v115 = vld [vmem:[%s2] sm:$0x3]
    %v117 = vlaneseq
    %v118 = vshrl.u32 %v117, 7
    %v119 = vsub.s32 0, %v118
    %v120 = vrot.slane %v115, %v119
    %v121 = vlaneseq
    %v122 = vshrl.u32 %v121, 7
    %v123 = vsub.s32 1, %v122
    %v124 = vrot.slane %v115, %v123
    %v131 = vunpack.c.l.b16 %v63
    %v132 = vunpack.c.h.b16 %v63
    %v133 = vunpack.c.l.b16 %v64
    %v134 = vunpack.c.l.b16 %v65
    %v135 = vunpack.c.h.b16 %v65
    %v136 = vunpack.c.l.b16 %v66
    %v137 = vpack.c.b16 %v134, %v131
    %v138 = vpack.c.b16 %v135, %v132
    %v139 = vpack.c.b16 %v136, %v133
    %v191 = vunpack.c.l.b16 %v67
    %v192 = vunpack.c.h.b16 %v67
    %v193 = vunpack.c.l.b16 %v68
    %v194 = vunpack.c.h.b16 %v68
    %v195 = vunpack.c.l.b16 %v69
    %v196 = vunpack.c.h.b16 %v69
    %v197 = vunpack.c.l.b16 %v70
    %v198 = vunpack.c.h.b16 %v70
    %v199 = vunpack.c.l.b16 %v71
    %v200 = vunpack.c.h.b16 %v71
    %v201 = vunpack.c.l.b16 %v72
    %v202 = vunpack.c.h.b16 %v72
    %v203 = vunpack.c.l.b16 %v73
    %v204 = vunpack.c.h.b16 %v73
    %v205 = vunpack.c.l.b16 %v74
    %v206 = vunpack.c.h.b16 %v74
    %v207 = vunpack.c.l.b16 %v75
    %v208 = vunpack.c.h.b16 %v75
    %v209 = vunpack.c.l.b16 %v76
    %v210 = vunpack.c.h.b16 %v76
    %v211 = vunpack.c.l.b16 %v77
    %v212 = vunpack.c.h.b16 %v77
    %v213 = vunpack.c.l.b16 %v78
    %v214 = vunpack.c.h.b16 %v78
    %v215 = vunpack.c.l.b16 %v79
    %v216 = vunpack.c.h.b16 %v79
    %v217 = vunpack.c.l.b16 %v80
    %v218 = vunpack.c.h.b16 %v80
    %v219 = vunpack.c.l.b16 %v81
    %v220 = vunpack.c.h.b16 %v81
    %v221 = vunpack.c.l.b16 %v82
    %v222 = vunpack.c.h.b16 %v82
    %v223 = vunpack.c.l.b16 %v83
    %v224 = vunpack.c.h.b16 %v83
    %v225 = vunpack.c.l.b16 %v84
    %v226 = vunpack.c.h.b16 %v84
    %v227 = vunpack.c.l.b16 %v85
    %v228 = vunpack.c.h.b16 %v85
    %v229 = vunpack.c.l.b16 %v86
    %v230 = vunpack.c.h.b16 %v86
    %v231 = vunpack.c.l.b16 %v87
    %v232 = vunpack.c.h.b16 %v87
    %v233 = vunpack.c.l.b16 %v88
    %v234 = vunpack.c.h.b16 %v88
    %v235 = vunpack.c.l.b16 %v89
    %v236 = vunpack.c.h.b16 %v89
    %v237 = vunpack.c.l.b16 %v90
    %v238 = vunpack.c.h.b16 %v90
    %v239 = vunpack.c.l.b16 %v91
    %v240 = vunpack.c.h.b16 %v91
    %v241 = vunpack.c.l.b16 %v92
    %v242 = vunpack.c.h.b16 %v92
    %v243 = vunpack.c.l.b16 %v93
    %v244 = vunpack.c.h.b16 %v93
    %v245 = vunpack.c.l.b16 %v94
    %v246 = vunpack.c.h.b16 %v94
    %v247 = vunpack.c.l.b16 %v95
    %v248 = vunpack.c.h.b16 %v95
    %v249 = vunpack.c.l.b16 %v96
    %v250 = vunpack.c.h.b16 %v96
    %v251 = vunpack.c.l.b16 %v97
    %v252 = vunpack.c.h.b16 %v97
    %v253 = vunpack.c.l.b16 %v98
    %v254 = vunpack.c.h.b16 %v98
    %v255 = vunpack.c.l.b16 %v99
    %v256 = vunpack.c.h.b16 %v99
    %v257 = vunpack.c.l.b16 %v100
    %v258 = vunpack.c.h.b16 %v100
    %v259 = vunpack.c.l.b16 %v101
    %v260 = vunpack.c.h.b16 %v101
    %v261 = vunpack.c.l.b16 %v102
    %v262 = vunpack.c.h.b16 %v102
    %v263 = vunpack.c.l.b16 %v103
    %v264 = vunpack.c.h.b16 %v103
    %v265 = vunpack.c.l.b16 %v104
    %v266 = vunpack.c.h.b16 %v104
    %v267 = vunpack.c.l.b16 %v105
    %v268 = vunpack.c.h.b16 %v105
    %v269 = vunpack.c.l.b16 %v106
    %v270 = vunpack.c.h.b16 %v106
    %v271 = vunpack.c.l.b16 %v107
    %v272 = vunpack.c.h.b16 %v107
    %v273 = vunpack.c.l.b16 %v108
    %v274 = vunpack.c.h.b16 %v108
    %v275 = vunpack.c.l.b16 %v109
    %v276 = vunpack.c.h.b16 %v109
    %v277 = vunpack.c.l.b16 %v110
    %v278 = vunpack.c.h.b16 %v110
    %v279 = vunpack.c.l.b16 %v111
    %v280 = vunpack.c.h.b16 %v111
    %v281 = vunpack.c.l.b16 %v112
    %v282 = vunpack.c.h.b16 %v112
    %v283 = vunpack.c.l.b16 %v113
    %v284 = vunpack.c.h.b16 %v113
    %v285 = vunpack.c.l.b16 %v114
    %v286 = vunpack.c.h.b16 %v114
    %v287 = vpack.c.b16 %v193, %v191
    %v288 = vpack.c.b16 %v194, %v192
    %v289 = vpack.c.b16 %v197, %v195
    %v290 = vpack.c.b16 %v198, %v196
    %v291 = vpack.c.b16 %v201, %v199
    %v292 = vpack.c.b16 %v202, %v200
    %v293 = vpack.c.b16 %v205, %v203
    %v294 = vpack.c.b16 %v206, %v204
    %v295 = vpack.c.b16 %v209, %v207
    %v296 = vpack.c.b16 %v210, %v208
    %v297 = vpack.c.b16 %v213, %v211
    %v298 = vpack.c.b16 %v214, %v212
    %v299 = vpack.c.b16 %v217, %v215
    %v300 = vpack.c.b16 %v218, %v216
    %v301 = vpack.c.b16 %v221, %v219
    %v302 = vpack.c.b16 %v222, %v220
    %v303 = vpack.c.b16 %v225, %v223
    %v304 = vpack.c.b16 %v226, %v224
    %v305 = vpack.c.b16 %v229, %v227
    %v306 = vpack.c.b16 %v230, %v228
    %v307 = vpack.c.b16 %v233, %v231
    %v308 = vpack.c.b16 %v234, %v232
    %v309 = vpack.c.b16 %v237, %v235
    %v310 = vpack.c.b16 %v238, %v236
    %v311 = vpack.c.b16 %v241, %v239
    %v312 = vpack.c.b16 %v242, %v240
    %v313 = vpack.c.b16 %v245, %v243
    %v314 = vpack.c.b16 %v246, %v244
    %v315 = vpack.c.b16 %v249, %v247
    %v316 = vpack.c.b16 %v250, %v248
    %v317 = vpack.c.b16 %v253, %v251
    %v318 = vpack.c.b16 %v254, %v252
    %v319 = vpack.c.b16 %v257, %v255
    %v320 = vpack.c.b16 %v258, %v256
    %v321 = vpack.c.b16 %v261, %v259
    %v322 = vpack.c.b16 %v262, %v260
    %v323 = vpack.c.b16 %v265, %v263
    %v324 = vpack.c.b16 %v266, %v264
    %v325 = vpack.c.b16 %v269, %v267
    %v326 = vpack.c.b16 %v270, %v268
    %v327 = vpack.c.b16 %v273, %v271
    %v328 = vpack.c.b16 %v274, %v272
    %v329 = vpack.c.b16 %v277, %v275
    %v330 = vpack.c.b16 %v278, %v276
    %v331 = vpack.c.b16 %v281, %v279
    %v332 = vpack.c.b16 %v282, %v280
    %v333 = vpack.c.b16 %v285, %v283
    %v334 = vpack.c.b16 %v286, %v284
    %383 = vmatprep.subr.bf16.mxu0 %v288
    %384 = vmatpush1.bf16.msra.mxu0 %v287
    %385 = vmatprep.subr.bf16.mxu0 %v290
    %386 = vmatpush1.bf16.msra.mxu0 %v289
    %387 = vmatprep.subr.bf16.mxu0 %v292
    %388 = vmatpush1.bf16.msra.mxu0 %v291
    %389 = vmatprep.subr.bf16.mxu0 %v294
    %390 = vmatpush1.bf16.msra.mxu0 %v293
    %391 = vmatprep.subr.bf16.mxu0 %v296
    %392 = vmatpush1.bf16.msra.mxu0 %v295
    %393 = vmatprep.subr.bf16.mxu0 %v298
    %394 = vmatpush1.bf16.msra.mxu0 %v297
    %395 = vmatprep.subr.bf16.mxu0 %v300
    %396 = vmatpush1.bf16.msra.mxu0 %v299
    %397 = vmatprep.subr.bf16.mxu0 %v302
    %398 = vmatpush1.bf16.msra.mxu0 %v301
    %399 = vmatprep.subr.bf16.mxu0 %v304
    %400 = vmatpush1.bf16.msra.mxu0 %v303
    %401 = vmatprep.subr.bf16.mxu0 %v306
    %402 = vmatpush1.bf16.msra.mxu0 %v305
    %403 = vmatprep.subr.bf16.mxu0 %v308
    %404 = vmatpush1.bf16.msra.mxu0 %v307
    %405 = vmatprep.subr.bf16.mxu0 %v310
    %406 = vmatpush1.bf16.msra.mxu0 %v309
    %407 = vmatprep.subr.bf16.mxu0 %v312
    %408 = vmatpush1.bf16.msra.mxu0 %v311
    %409 = vmatprep.subr.bf16.mxu0 %v314
    %410 = vmatpush1.bf16.msra.mxu0 %v313
    %411 = vmatprep.subr.bf16.mxu0 %v316
    %412 = vmatpush1.bf16.msra.mxu0 %v315
    %413 = vmatprep.subr.bf16.mxu0 %v318
    %414 = vmatpush1.bf16.msra.mxu0 %v317
    %415 = vmatprep.mubr.bf16.mxu0 %v138
    %416 = vmatmul.mubr.bf16.gmra.mrb[0].mxu0 %v137
    %v417 = vpop.f32.mrb[0].mxu0
    %v418 = vadd.f32 %v120, %v417
    %v419 = vpop.f32.mrb[0].mxu0
    %v420 = vadd.f32 %v124, %v419
    %v421 = vpop.f32.mrb[0].mxu0
    %v422 = vadd.f32 %v120, %v421
    %v423 = vpop.f32.mrb[0].mxu0
    %v424 = vadd.f32 %v124, %v423
    %425 = vdwg.mxu0
    %426 = vmatprep.subr.bf16.mxu0 %v320
    %427 = vmatpush1.bf16.msra.mxu0 %v319
    %428 = vmatprep.subr.bf16.mxu0 %v322
    %429 = vmatpush1.bf16.msra.mxu0 %v321
    %430 = vmatprep.subr.bf16.mxu0 %v324
    %431 = vmatpush1.bf16.msra.mxu0 %v323
    %432 = vmatprep.subr.bf16.mxu0 %v326
    %433 = vmatpush1.bf16.msra.mxu0 %v325
    %434 = vmatprep.subr.bf16.mxu0 %v328
    %435 = vmatpush1.bf16.msra.mxu0 %v327
    %436 = vmatprep.subr.bf16.mxu0 %v330
    %437 = vmatpush1.bf16.msra.mxu0 %v329
    %438 = vmatprep.subr.bf16.mxu0 %v332
    %439 = vmatpush1.bf16.msra.mxu0 %v331
    %440 = vmatprep.subr.bf16.mxu0 %v334
    %441 = vmatpush1.bf16.msra.mxu0 %v333
    %442 = vmatprep.subr.bf16.mxu0 0
    %443 = vmatpush1.bf16.msra.mxu0 0
    %444 = vmatprep.subr.bf16.mxu0 0
    %445 = vmatpush1.bf16.msra.mxu0 0
    %446 = vmatprep.subr.bf16.mxu0 0
    %447 = vmatpush1.bf16.msra.mxu0 0
    %448 = vmatprep.subr.bf16.mxu0 0
    %449 = vmatpush1.bf16.msra.mxu0 0
    %450 = vmatprep.subr.bf16.mxu0 0
    %451 = vmatpush1.bf16.msra.mxu0 0
    %452 = vmatprep.subr.bf16.mxu0 0
    %453 = vmatpush1.bf16.msra.mxu0 0
    %454 = vmatprep.subr.bf16.mxu0 0
    %455 = vmatpush1.bf16.msra.mxu0 0
    %456 = vmatprep.subr.bf16.mxu0 0
    %457 = vmatpush1.bf16.msra.mxu0 0
    %458 = vmatprep.mubr.bf16.mxu0 0
    %459 = vmatmul.mubr.bf16.gmra.mrb[0].mxu0 %v139
    %v460 = vpop.f32.mrb[0].mxu0
    %v461 = vadd.f32 %v418, %v460
    %v462 = vpop.f32.mrb[0].mxu0
    %v463 = vadd.f32 %v420, %v462
    %v464 = vpop.f32.mrb[0].mxu0
    %v465 = vadd.f32 %v422, %v464
    %v466 = vpop.f32.mrb[0].mxu0
    %v467 = vadd.f32 %v424, %v466
    %468 = vdwg.mxu0
    %v469 = vxor.u32 %v461, 2147483648
    %v470 = vxor.u32 %v463, 2147483648
    %v471 = vxor.u32 %v465, 2147483648
    %v472 = vxor.u32 %v467, 2147483648
    %v473 = vmul.f32 %v469, 1.442695
    %v474 = vpow.pop %v473
    %v475 = vmul.f32 %v470, 1.442695
    %v476 = vpow.pop %v475
    %v477 = vmul.f32 %v471, 1.442695
    %v478 = vpow.pop %v477
    %v479 = vmul.f32 %v472, 1.442695
    %v480 = vpow.pop %v479
    %v481 = vadd.f32 %v474, 1.0
    %v482 = vadd.f32 %v476, 1.0
    %v483 = vadd.f32 %v478, 1.0
    %v484 = vadd.f32 %v480, 1.0
    %v485 = vrcp.pop %v481
    %v486 = vmul.f32 1.0, %v485
    %v487 = vrcp.pop %v482
    %v488 = vmul.f32 1.0, %v487
    %v489 = vrcp.pop %v483
    %v490 = vmul.f32 1.0, %v489
    %v491 = vrcp.pop %v484
    %v492 = vmul.f32 1.0, %v491
    %v493 = vpack.c.bf16 %v490, %v486
    %v494 = vpack.c.bf16 %v492, %v488
    %v495 = vld [vmem:[#allocation7] sm:$0xff]
    %v496 = vld [vmem:[#allocation7 + $0x8] sm:$0xff]
    %v497 = vld [vmem:[#allocation7 + $0x10] sm:$0xff]
    %v498 = vld [vmem:[#allocation7 + $0x18] sm:$0xff]
    %v499 = vld [vmem:[#allocation7 + $0x20] sm:$0xff]
    %v500 = vld [vmem:[#allocation7 + $0x28] sm:$0xff]
    %v501 = vld [vmem:[#allocation7 + $0x30] sm:$0xff]
    %v502 = vld [vmem:[#allocation7 + $0x38] sm:$0xff]
    %v503 = vld [vmem:[#allocation7 + $0x40] sm:$0xff]
    %v504 = vld [vmem:[#allocation7 + $0x48] sm:$0xff]
    %v505 = vld [vmem:[#allocation7 + $0x50] sm:$0xff]
    %v506 = vld [vmem:[#allocation7 + $0x58] sm:$0xff]
    %v507 = vld [vmem:[#allocation7 + $0x60] sm:$0xff]
    %v508 = vld [vmem:[#allocation7 + $0x68] sm:$0xff]
    %v509 = vld [vmem:[#allocation7 + $0x70] sm:$0xff]
    %v510 = vld [vmem:[#allocation7 + $0x78] sm:$0xff]
    %v511 = vld [vmem:[#allocation7 + $0x80] sm:$0xff]
    %v512 = vld [vmem:[#allocation7 + $0x88] sm:$0xff]
    %v513 = vld [vmem:[#allocation7 + $0x90] sm:$0xff]
    %v514 = vld [vmem:[#allocation7 + $0x98] sm:$0xff]
    %v515 = vld [vmem:[#allocation7 + $0xa0] sm:$0xff]
    %v516 = vld [vmem:[#allocation7 + $0xa8] sm:$0xff]
    %v517 = vld [vmem:[#allocation7 + $0xb0] sm:$0xff]
    %v518 = vld [vmem:[#allocation7 + $0xb8] sm:$0xff]
    %v519 = vld [vmem:[#allocation7 + $0xc0] sm:$0xff]
    %v520 = vld [vmem:[#allocation7 + $0xc8] sm:$0xff]
    %v521 = vld [vmem:[#allocation7 + $0xd0] sm:$0xff]
    %v522 = vld [vmem:[#allocation7 + $0xd8] sm:$0xff]
    %v523 = vld [vmem:[#allocation7 + $0xe0] sm:$0xff]
    %v524 = vld [vmem:[#allocation7 + $0xe8] sm:$0xff]
    %v525 = vld [vmem:[#allocation7 + $0xf0] sm:$0xff]
    %v526 = vld [vmem:[#allocation7 + $0xf8] sm:$0xff]
    %v527 = vld [vmem:[#allocation7 + $0x100] sm:$0xff]
    %v528 = vld [vmem:[#allocation7 + $0x108] sm:$0xff]
    %v529 = vld [vmem:[#allocation7 + $0x110] sm:$0xff]
    %v530 = vld [vmem:[#allocation7 + $0x118] sm:$0xff]
    %v531 = vld [vmem:[#allocation7 + $0x120] sm:$0xff]
    %v532 = vld [vmem:[#allocation7 + $0x128] sm:$0xff]
    %v533 = vld [vmem:[#allocation7 + $0x130] sm:$0xff]
    %v534 = vld [vmem:[#allocation7 + $0x138] sm:$0xff]
    %v535 = vld [vmem:[#allocation7 + $0x140] sm:$0xff]
    %v536 = vld [vmem:[#allocation7 + $0x148] sm:$0xff]
    %v537 = vld [vmem:[#allocation7 + $0x150] sm:$0xff]
    %v538 = vld [vmem:[#allocation7 + $0x158] sm:$0xff]
    %v539 = vld [vmem:[#allocation7 + $0x160] sm:$0xff]
    %v540 = vld [vmem:[#allocation7 + $0x168] sm:$0xff]
    %v541 = vld [vmem:[#allocation7 + $0x170] sm:$0xff]
    %v542 = vld [vmem:[#allocation7 + $0x178] sm:$0xff]
    %v543 = vld [vmem:[#allocation7 + $0x180] sm:$0xff]
    %v544 = vld [vmem:[#allocation7 + $0x188] sm:$0xff]
    %v545 = vld [vmem:[#allocation7 + $0x190] sm:$0xff]
    %v546 = vld [vmem:[#allocation7 + $0x198] sm:$0xff]
    %v547 = vld [vmem:[#allocation7 + $0x1a0] sm:$0xff]
    %v548 = vld [vmem:[#allocation7 + $0x1a8] sm:$0xff]
    %v549 = vld [vmem:[#allocation7 + $0x1b0] sm:$0xff]
    %v550 = vld [vmem:[#allocation7 + $0x1b8] sm:$0xff]
    %v551 = vld [vmem:[#allocation7 + $0x1c0] sm:$0xff]
    %v552 = vld [vmem:[#allocation7 + $0x1c8] sm:$0xff]
    %v553 = vld [vmem:[#allocation7 + $0x1d0] sm:$0xff]
    %v554 = vld [vmem:[#allocation7 + $0x1d8] sm:$0xff]
    %v555 = vld [vmem:[#allocation7 + $0x1e0] sm:$0xff]
    %v556 = vld [vmem:[#allocation7 + $0x1e8] sm:$0xff]
    %v557 = vld [vmem:[#allocation7 + $0x1f0] sm:$0xff]
    %v558 = vld [vmem:[#allocation7 + $0x1f8] sm:$0xff]
    %v559 = vld [vmem:[%s4] sm:$0xf]
    %v561 = vlaneseq
    %v562 = vshrl.u32 %v561, 7
    %v563 = vsub.s32 0, %v562
    %v564 = vrot.slane %v559, %v563
    %v565 = vlaneseq
    %v566 = vshrl.u32 %v565, 7
    %v567 = vsub.s32 1, %v566
    %v568 = vrot.slane %v559, %v567
    %v569 = vlaneseq
    %v570 = vshrl.u32 %v569, 7
    %v571 = vsub.s32 2, %v570
    %v572 = vrot.slane %v559, %v571
    %v573 = vlaneseq
    %v574 = vshrl.u32 %v573, 7
    %v575 = vsub.s32 3, %v574
    %v576 = vrot.slane %v559, %v575
    %v645 = vunpack.c.l.b16 %v495
    %v646 = vunpack.c.h.b16 %v495
    %v647 = vunpack.c.l.b16 %v496
    %v648 = vunpack.c.h.b16 %v496
    %v649 = vunpack.c.l.b16 %v497
    %v650 = vunpack.c.h.b16 %v497
    %v651 = vunpack.c.l.b16 %v498
    %v652 = vunpack.c.h.b16 %v498
    %v653 = vunpack.c.l.b16 %v499
    %v654 = vunpack.c.h.b16 %v499
    %v655 = vunpack.c.l.b16 %v500
    %v656 = vunpack.c.h.b16 %v500
    %v657 = vunpack.c.l.b16 %v501
    %v658 = vunpack.c.h.b16 %v501
    %v659 = vunpack.c.l.b16 %v502
    %v660 = vunpack.c.h.b16 %v502
    %v661 = vunpack.c.l.b16 %v503
    %v662 = vunpack.c.h.b16 %v503
    %v663 = vunpack.c.l.b16 %v504
    %v664 = vunpack.c.h.b16 %v504
    %v665 = vunpack.c.l.b16 %v505
    %v666 = vunpack.c.h.b16 %v505
    %v667 = vunpack.c.l.b16 %v506
    %v668 = vunpack.c.h.b16 %v506
    %v669 = vunpack.c.l.b16 %v507
    %v670 = vunpack.c.h.b16 %v507
    %v671 = vunpack.c.l.b16 %v508
    %v672 = vunpack.c.h.b16 %v508
    %v673 = vunpack.c.l.b16 %v509
    %v674 = vunpack.c.h.b16 %v509
    %v675 = vunpack.c.l.b16 %v510
    %v676 = vunpack.c.h.b16 %v510
    %v677 = vunpack.c.l.b16 %v511
    %v678 = vunpack.c.h.b16 %v511
    %v679 = vunpack.c.l.b16 %v512
    %v680 = vunpack.c.h.b16 %v512
    %v681 = vunpack.c.l.b16 %v513
    %v682 = vunpack.c.h.b16 %v513
    %v683 = vunpack.c.l.b16 %v514
    %v684 = vunpack.c.h.b16 %v514
    %v685 = vunpack.c.l.b16 %v515
    %v686 = vunpack.c.h.b16 %v515
    %v687 = vunpack.c.l.b16 %v516
    %v688 = vunpack.c.h.b16 %v516
    %v689 = vunpack.c.l.b16 %v517
    %v690 = vunpack.c.h.b16 %v517
    %v691 = vunpack.c.l.b16 %v518
    %v692 = vunpack.c.h.b16 %v518
    %v693 = vunpack.c.l.b16 %v519
    %v694 = vunpack.c.h.b16 %v519
    %v695 = vunpack.c.l.b16 %v520
    %v696 = vunpack.c.h.b16 %v520
    %v697 = vunpack.c.l.b16 %v521
    %v698 = vunpack.c.h.b16 %v521
    %v699 = vunpack.c.l.b16 %v522
    %v700 = vunpack.c.h.b16 %v522
    %v701 = vunpack.c.l.b16 %v523
    %v702 = vunpack.c.h.b16 %v523
    %v703 = vunpack.c.l.b16 %v524
    %v704 = vunpack.c.h.b16 %v524
    %v705 = vunpack.c.l.b16 %v525
    %v706 = vunpack.c.h.b16 %v525
    %v707 = vunpack.c.l.b16 %v526
    %v708 = vunpack.c.h.b16 %v526
    %v709 = vunpack.c.l.b16 %v527
    %v710 = vunpack.c.h.b16 %v527
    %v711 = vunpack.c.l.b16 %v528
    %v712 = vunpack.c.h.b16 %v528
    %v713 = vunpack.c.l.b16 %v529
    %v714 = vunpack.c.h.b16 %v529
    %v715 = vunpack.c.l.b16 %v530
    %v716 = vunpack.c.h.b16 %v530
    %v717 = vunpack.c.l.b16 %v531
    %v718 = vunpack.c.h.b16 %v531
    %v719 = vunpack.c.l.b16 %v532
    %v720 = vunpack.c.h.b16 %v532
    %v721 = vunpack.c.l.b16 %v533
    %v722 = vunpack.c.h.b16 %v533
    %v723 = vunpack.c.l.b16 %v534
    %v724 = vunpack.c.h.b16 %v534
    %v725 = vunpack.c.l.b16 %v535
    %v726 = vunpack.c.h.b16 %v535
    %v727 = vunpack.c.l.b16 %v536
    %v728 = vunpack.c.h.b16 %v536
    %v729 = vunpack.c.l.b16 %v537
    %v730 = vunpack.c.h.b16 %v537
    %v731 = vunpack.c.l.b16 %v538
    %v732 = vunpack.c.h.b16 %v538
    %v733 = vunpack.c.l.b16 %v539
    %v734 = vunpack.c.h.b16 %v539
    %v735 = vunpack.c.l.b16 %v540
    %v736 = vunpack.c.h.b16 %v540
    %v737 = vunpack.c.l.b16 %v541
    %v738 = vunpack.c.h.b16 %v541
    %v739 = vunpack.c.l.b16 %v542
    %v740 = vunpack.c.h.b16 %v542
    %v741 = vunpack.c.l.b16 %v543
    %v742 = vunpack.c.h.b16 %v543
    %v743 = vunpack.c.l.b16 %v544
    %v744 = vunpack.c.h.b16 %v544
    %v745 = vunpack.c.l.b16 %v545
    %v746 = vunpack.c.h.b16 %v545
    %v747 = vunpack.c.l.b16 %v546
    %v748 = vunpack.c.h.b16 %v546
    %v749 = vunpack.c.l.b16 %v547
    %v750 = vunpack.c.h.b16 %v547
    %v751 = vunpack.c.l.b16 %v548
    %v752 = vunpack.c.h.b16 %v548
    %v753 = vunpack.c.l.b16 %v549
    %v754 = vunpack.c.h.b16 %v549
    %v755 = vunpack.c.l.b16 %v550
    %v756 = vunpack.c.h.b16 %v550
    %v757 = vunpack.c.l.b16 %v551
    %v758 = vunpack.c.h.b16 %v551
    %v759 = vunpack.c.l.b16 %v552
    %v760 = vunpack.c.h.b16 %v552
    %v761 = vunpack.c.l.b16 %v553
    %v762 = vunpack.c.h.b16 %v553
    %v763 = vunpack.c.l.b16 %v554
    %v764 = vunpack.c.h.b16 %v554
    %v765 = vunpack.c.l.b16 %v555
    %v766 = vunpack.c.h.b16 %v555
    %v767 = vunpack.c.l.b16 %v556
    %v768 = vunpack.c.h.b16 %v556
    %v769 = vunpack.c.l.b16 %v557
    %v770 = vunpack.c.h.b16 %v557
    %v771 = vunpack.c.l.b16 %v558
    %v772 = vunpack.c.h.b16 %v558
    %v773 = vpack.c.b16 %v649, %v645
    %v774 = vpack.c.b16 %v650, %v646
    %v775 = vpack.c.b16 %v651, %v647
    %v776 = vpack.c.b16 %v652, %v648
    %v777 = vpack.c.b16 %v657, %v653
    %v778 = vpack.c.b16 %v658, %v654
    %v779 = vpack.c.b16 %v659, %v655
    %v780 = vpack.c.b16 %v660, %v656
    %v781 = vpack.c.b16 %v665, %v661
    %v782 = vpack.c.b16 %v666, %v662
    %v783 = vpack.c.b16 %v667, %v663
    %v784 = vpack.c.b16 %v668, %v664
    %v785 = vpack.c.b16 %v673, %v669
    %v786 = vpack.c.b16 %v674, %v670
    %v787 = vpack.c.b16 %v675, %v671
    %v788 = vpack.c.b16 %v676, %v672
    %v789 = vpack.c.b16 %v681, %v677
    %v790 = vpack.c.b16 %v682, %v678
    %v791 = vpack.c.b16 %v683, %v679
    %v792 = vpack.c.b16 %v684, %v680
    %v793 = vpack.c.b16 %v689, %v685
    %v794 = vpack.c.b16 %v690, %v686
    %v795 = vpack.c.b16 %v691, %v687
    %v796 = vpack.c.b16 %v692, %v688
    %v797 = vpack.c.b16 %v697, %v693
    %v798 = vpack.c.b16 %v698, %v694
    %v799 = vpack.c.b16 %v699, %v695
    %v800 = vpack.c.b16 %v700, %v696
    %v801 = vpack.c.b16 %v705, %v701
    %v802 = vpack.c.b16 %v706, %v702
    %v803 = vpack.c.b16 %v707, %v703
    %v804 = vpack.c.b16 %v708, %v704
    %v805 = vpack.c.b16 %v713, %v709
    %v806 = vpack.c.b16 %v714, %v710
    %v807 = vpack.c.b16 %v715, %v711
    %v808 = vpack.c.b16 %v716, %v712
    %v809 = vpack.c.b16 %v721, %v717
    %v810 = vpack.c.b16 %v722, %v718
    %v811 = vpack.c.b16 %v723, %v719
    %v812 = vpack.c.b16 %v724, %v720
    %v813 = vpack.c.b16 %v729, %v725
    %v814 = vpack.c.b16 %v730, %v726
    %v815 = vpack.c.b16 %v731, %v727
    %v816 = vpack.c.b16 %v732, %v728
    %v817 = vpack.c.b16 %v737, %v733
    %v818 = vpack.c.b16 %v738, %v734
    %v819 = vpack.c.b16 %v739, %v735
    %v820 = vpack.c.b16 %v740, %v736
    %v821 = vpack.c.b16 %v745, %v741
    %v822 = vpack.c.b16 %v746, %v742
    %v823 = vpack.c.b16 %v747, %v743
    %v824 = vpack.c.b16 %v748, %v744
    %v825 = vpack.c.b16 %v753, %v749
    %v826 = vpack.c.b16 %v754, %v750
    %v827 = vpack.c.b16 %v755, %v751
    %v828 = vpack.c.b16 %v756, %v752
    %v829 = vpack.c.b16 %v761, %v757
    %v830 = vpack.c.b16 %v762, %v758
    %v831 = vpack.c.b16 %v763, %v759
    %v832 = vpack.c.b16 %v764, %v760
    %v833 = vpack.c.b16 %v769, %v765
    %v834 = vpack.c.b16 %v770, %v766
    %v835 = vpack.c.b16 %v771, %v767
    %v836 = vpack.c.b16 %v772, %v768
    %901 = vmatprep.subr.bf16.mxu0 %v774
    %902 = vmatpush1.bf16.msra.mxu0 %v773
    %903 = vmatprep.subr.bf16.mxu0 %v778
    %904 = vmatpush1.bf16.msra.mxu0 %v777
    %905 = vmatprep.subr.bf16.mxu0 %v782
    %906 = vmatpush1.bf16.msra.mxu0 %v781
    %907 = vmatprep.subr.bf16.mxu0 %v786
    %908 = vmatpush1.bf16.msra.mxu0 %v785
    %909 = vmatprep.subr.bf16.mxu0 %v790
    %910 = vmatpush1.bf16.msra.mxu0 %v789
    %911 = vmatprep.subr.bf16.mxu0 %v794
    %912 = vmatpush1.bf16.msra.mxu0 %v793
    %913 = vmatprep.subr.bf16.mxu0 %v798
    %914 = vmatpush1.bf16.msra.mxu0 %v797
    %915 = vmatprep.subr.bf16.mxu0 %v802
    %916 = vmatpush1.bf16.msra.mxu0 %v801
    %917 = vmatprep.subr.bf16.mxu0 %v806
    %918 = vmatpush1.bf16.msra.mxu0 %v805
    %919 = vmatprep.subr.bf16.mxu0 %v810
    %920 = vmatpush1.bf16.msra.mxu0 %v809
    %921 = vmatprep.subr.bf16.mxu0 %v814
    %922 = vmatpush1.bf16.msra.mxu0 %v813
    %923 = vmatprep.subr.bf16.mxu0 %v818
    %924 = vmatpush1.bf16.msra.mxu0 %v817
    %925 = vmatprep.subr.bf16.mxu0 %v822
    %926 = vmatpush1.bf16.msra.mxu0 %v821
    %927 = vmatprep.subr.bf16.mxu0 %v826
    %928 = vmatpush1.bf16.msra.mxu0 %v825
    %929 = vmatprep.subr.bf16.mxu0 %v830
    %930 = vmatpush1.bf16.msra.mxu0 %v829
    %931 = vmatprep.subr.bf16.mxu0 %v834
    %932 = vmatpush1.bf16.msra.mxu0 %v833
    %933 = vmatprep.mubr.bf16.mxu0 %v494
    %934 = vmatmul.mubr.bf16.gmra.mrb[0].mxu0 %v493
    %v935 = vpop.f32.mrb[0].mxu0
    %v936 = vadd.f32 %v564, %v935
    %v937 = vpop.f32.mrb[0].mxu0
    %v938 = vadd.f32 %v568, %v937
    %v939 = vpop.f32.mrb[0].mxu0
    %v940 = vadd.f32 %v564, %v939
    %v941 = vpop.f32.mrb[0].mxu0
    %v942 = vadd.f32 %v568, %v941
    %943 = vdwg.mxu0
    %944 = vmatprep.subr.bf16.mxu0 %v776
    %945 = vmatpush1.bf16.msra.mxu0 %v775
    %946 = vmatprep.subr.bf16.mxu0 %v780
    %947 = vmatpush1.bf16.msra.mxu0 %v779
    %948 = vmatprep.subr.bf16.mxu0 %v784
    %949 = vmatpush1.bf16.msra.mxu0 %v783
    %950 = vmatprep.subr.bf16.mxu0 %v788
    %951 = vmatpush1.bf16.msra.mxu0 %v787
    %952 = vmatprep.subr.bf16.mxu0 %v792
    %953 = vmatpush1.bf16.msra.mxu0 %v791
    %954 = vmatprep.subr.bf16.mxu0 %v796
    %955 = vmatpush1.bf16.msra.mxu0 %v795
    %956 = vmatprep.subr.bf16.mxu0 %v800
    %957 = vmatpush1.bf16.msra.mxu0 %v799
    %958 = vmatprep.subr.bf16.mxu0 %v804
    %959 = vmatpush1.bf16.msra.mxu0 %v803
    %960 = vmatprep.subr.bf16.mxu0 %v808
    %961 = vmatpush1.bf16.msra.mxu0 %v807
    %962 = vmatprep.subr.bf16.mxu0 %v812
    %963 = vmatpush1.bf16.msra.mxu0 %v811
    %964 = vmatprep.subr.bf16.mxu0 %v816
    %965 = vmatpush1.bf16.msra.mxu0 %v815
    %966 = vmatprep.subr.bf16.mxu0 %v820
    %967 = vmatpush1.bf16.msra.mxu0 %v819
    %968 = vmatprep.subr.bf16.mxu0 %v824
    %969 = vmatpush1.bf16.msra.mxu0 %v823
    %970 = vmatprep.subr.bf16.mxu0 %v828
    %971 = vmatpush1.bf16.msra.mxu0 %v827
    %972 = vmatprep.subr.bf16.mxu0 %v832
    %973 = vmatpush1.bf16.msra.mxu0 %v831
    %974 = vmatprep.subr.bf16.mxu0 %v836
    %975 = vmatpush1.bf16.msra.mxu0 %v835
    %976 = vmatprep.mubr.bf16.mxu0 %v494
    %977 = vmatmul.mubr.bf16.gmra.mrb[0].mxu0 %v493
    %v978 = vpop.f32.mrb[0].mxu0
    %v979 = vadd.f32 %v572, %v978
    %v980 = vpop.f32.mrb[0].mxu0
    %v981 = vadd.f32 %v576, %v980
    %v982 = vpop.f32.mrb[0].mxu0
    %v983 = vadd.f32 %v572, %v982
    %v984 = vpop.f32.mrb[0].mxu0
    %v985 = vadd.f32 %v576, %v984
    %986 = vdwg.mxu0
    %987 = vst [vmem:[#allocation8] sm:$0xff] %v936
    %988 = vst [vmem:[#allocation8 + $0x8] sm:$0xff] %v938
    %989 = vst [vmem:[#allocation8 + $0x10] sm:$0xff] %v979
    %990 = vst [vmem:[#allocation8 + $0x18] sm:$0xff] %v981
    %991 = vst [vmem:[#allocation8 + $0x20] sm:$0xff] %v940
    %992 = vst [vmem:[#allocation8 + $0x28] sm:$0xff] %v942
    %993 = vst [vmem:[#allocation8 + $0x30] sm:$0xff] %v983
    %994 = vst [vmem:[#allocation8 + $0x38] sm:$0xff] %v985
    // Predicated region
    $region34: #{tpu_custom_call.1} parent=1 // pred_check
      _
    $region35: #{tpu_custom_call.1} parent=1 // pred_check_branch
      %996 = sbr.rel (0) target = $region37
    $region36: #{tpu_custom_call.1} parent=1 // pred_region
      %s998 = ssub.s32 1024, 1024
      %999 = vsyncadd [#allocation4], %s998
      %s1000 = sshll.u32 [#allocation8], 4
      %s1001 = int_to_ptr.vmem [resolvable:$true] %s1000
      %1006 = dma.vmem_to_hbm [thread:$0]  %s1001, 1024, %s5, [#allocation4], 512, 512, 32
    $region37: #{tpu_custom_call.1} parent=1 // pred_fallthru
      _
    // Predicated region
    $region38: #{tpu_custom_call.1} parent=1 // pred_check
      _
    $region39: #{tpu_custom_call.1} parent=1 // pred_check_branch
      %1008 = sbr.rel (0) target = $region41
    $region40: #{tpu_custom_call.1} parent=1 // pred_region
      %1009 = dma.done [#allocation4], 1024
    $region41: #{tpu_custom_call.1} parent=1 // pred_fallthru
      _
    %1010 = vsyncpa [#allocation3], 1
    %1011 = vsyncpa [#allocation6], 1
    %1012 = vsyncpa [#allocation4], 1

</llo_original>
